<compile_context>
chip_gen: v5e
topology: v5e:2x2
jax: 0.10.0
libtpu: 0.0.40
codegen_flags: <defaults>
</compile_context>

<pallas_src>
import functools

import jax
import jax.numpy as jnp
from jax import lax
from jax.experimental import pallas as pl
from jax.experimental.pallas import tpu as pltpu


# ----------------------------------------------------------------------------
# Fused LSTM layer kernel.
#   x_ref   : (T*B, E)  time-major, flattened over (t, b)
#   wih_ref : (E, 4H)   pre-transposed, gate columns reordered to [i, f, o, g]
#   whh_ref : (H, 4H)   pre-transposed, same column order
#   b_ref   : (1, 4H)   b_ih + b_hh, same column order
#   out_ref : (T*B, H) if emit_sequence else (B, H)
#   gx_sc   : VMEM scratch (T*B, 4H) holding the hoisted input projection
# ----------------------------------------------------------------------------
def _lstm_kernel(x_ref, wih_ref, whh_ref, b_ref, out_ref, gx_sc,
                 *, T, B, H, emit_sequence, unroll):
    # Phase 1: hoisted input projection for ALL timesteps in one MXU matmul.
    gx_sc[...] = (
        jnp.dot(x_ref[...], wih_ref[...], preferred_element_type=jnp.float32)
        + b_ref[...]
    )

    h0 = jnp.zeros((B, H), jnp.float32)
    c0 = jnp.zeros((B, H), jnp.float32)

    # Phase 2: recurrence — only the (B,H)x(H,4H) matmul + VPU/EUP work per step.
    def step(t, carry):
        h, c = carry
        row = pl.multiple_of(t * B, B)
        gates = gx_sc[pl.ds(row, B), :] + jnp.dot(
            h, whh_ref[...], preferred_element_type=jnp.float32)
        # Columns pre-reordered to [i, f, o, g]: one sigmoid slab, one tanh slab.
        sig = jax.nn.sigmoid(gates[:, : 3 * H])
        i_g = sig[:, 0 * H:1 * H]
        f_g = sig[:, 1 * H:2 * H]
        o_g = sig[:, 2 * H:3 * H]
        g_g = jnp.tanh(gates[:, 3 * H:4 * H])
        c_new = f_g * c + i_g * g_g
        h_new = o_g * jnp.tanh(c_new)
        if emit_sequence:
            out_ref[pl.ds(row, B), :] = h_new.astype(out_ref.dtype)
        return h_new, c_new

    h_final, _ = lax.fori_loop(0, T, step, (h0, c0), unroll=unroll)

    if not emit_sequence:
        out_ref[...] = h_final.astype(out_ref.dtype)


def lstm_layer(x_2d, wih_t, whh_t, b, *, T, B, emit_sequence):
    """x_2d: (T*B, E) time-major. Returns (T*B, H) if emit_sequence else (B, H)."""
    TB, E = x_2d.shape
    H = whh_t.shape[0]
    out_rows = TB if emit_sequence else B
    kernel = functools.partial(
        _lstm_kernel, T=T, B=B, H=H, emit_sequence=emit_sequence,
        unroll=bool(T <= 32))
    return pl.pallas_call(
        kernel,
        out_shape=jax.ShapeDtypeStruct((out_rows, H), jnp.float32),
        grid=(1,),
        in_specs=[
            pl.BlockSpec((TB, E), lambda i: (0, 0)),
            pl.BlockSpec((E, 4 * H), lambda i: (0, 0)),
            pl.BlockSpec((H, 4 * H), lambda i: (0, 0)),
            pl.BlockSpec((1, 4 * H), lambda i: (0, 0)),
        ],
        out_specs=pl.BlockSpec((out_rows, H), lambda i: (0, 0)),
        scratch_shapes=[pltpu.VMEM((TB, 4 * H), jnp.float32)],
        compiler_params=pltpu.CompilerParams(dimension_semantics=("arbitrary",)),
    )(x_2d, wih_t, whh_t, b)


# ----------------------------------------------------------------------------
# Fused MLP head: relu(h @ W1 + b1) -> ... -> relu(...) -> @ Wout + bout
# All layers chained inside one kernel; weights pre-transposed to (In, Out).
# ----------------------------------------------------------------------------
def _mlp_kernel(*refs, n_hidden):
    x_ref = refs[0]
    o_ref = refs[-1]
    wb = refs[1:-1]
    h = x_ref[...]
    for li in range(n_hidden + 1):
        w = wb[2 * li][...]
        b = wb[2 * li + 1][...]
        h = jnp.dot(h, w, preferred_element_type=jnp.float32) + b
        if li < n_hidden:
            h = jnp.maximum(h, 0.0)
        # TODO(synk): F.dropout after each hidden layer is stochastic
        # (training-mode); omitted for deterministic eval semantics.
    o_ref[...] = h.astype(o_ref.dtype)


def mlp_head(h, hidden_wb, output_wb):
    """h: (B, H). hidden_wb: list of (W^T (In,Out), b (1,Out)). output_wb same."""
    B = h.shape[0]
    layers = list(hidden_wb) + [output_wb]
    n_hidden = len(hidden_wb)
    args = [h]
    in_specs = [pl.BlockSpec(h.shape, lambda i: (0, 0))]
    for (w, b) in layers:
        args += [w, b]
        in_specs += [
            pl.BlockSpec(w.shape, lambda i: (0, 0)),
            pl.BlockSpec(b.shape, lambda i: (0, 0)),
        ]
    n_out = layers[-1][0].shape[1]
    return pl.pallas_call(
        functools.partial(_mlp_kernel, n_hidden=n_hidden),
        out_shape=jax.ShapeDtypeStruct((B, n_out), jnp.float32),
        grid=(1,),
        in_specs=in_specs,
        out_specs=pl.BlockSpec((B, n_out), lambda i: (0, 0)),
        compiler_params=pltpu.CompilerParams(dimension_semantics=("arbitrary",)),
    )(*args)


# ----------------------------------------------------------------------------
# Parameter construction (PyTorch-convention shapes) + one-time kernel layout prep
# ----------------------------------------------------------------------------
def init_params(key, *, vocab_size, vector_size, lstm_features, lstm_layers,
                hidden_layers, n_labels):
    params = {}
    n_keys = 1 + 4 * lstm_layers + 2 * (len(hidden_layers) + 1)
    keys = jax.random.split(key, n_keys)
    ki = iter(range(n_keys))

    emb = 0.1 * jax.random.normal(keys[next(ki)], (vocab_size, vector_size), jnp.float32)
    emb = emb.at[0].set(0.0)  # padding_idx=0
    params["embeddings"] = emb

    params["lstm"] = []
    for layer in range(lstm_layers):
        in_size = vector_size if layer == 0 else lstm_features
        s = 1.0 / jnp.sqrt(lstm_features)
        w_ih = s * jax.random.normal(keys[next(ki)], (4 * lstm_features, in_size), jnp.float32)
        w_hh = s * jax.random.normal(keys[next(ki)], (4 * lstm_features, lstm_features), jnp.float32)
        b_ih = s * jax.random.normal(keys[next(ki)], (4 * lstm_features,), jnp.float32)
        b_hh = s * jax.random.normal(keys[next(ki)], (4 * lstm_features,), jnp.float32)
        params["lstm"].append((w_ih, w_hh, b_ih, b_hh))

    params["hidden"] = []
    sizes = [lstm_features] + list(hidden_layers)
    for in_s, out_s in zip(sizes[:-1], sizes[1:]):
        s = 1.0 / jnp.sqrt(in_s)
        w = s * jax.random.normal(keys[next(ki)], (out_s, in_s), jnp.float32)
        b = s * jax.random.normal(keys[next(ki)], (out_s,), jnp.float32)
        params["hidden"].append((w, b))

    s = 1.0 / jnp.sqrt(hidden_layers[-1])
    w = s * jax.random.normal(keys[next(ki)], (n_labels, hidden_layers[-1]), jnp.float32)
    b = s * jax.random.normal(keys[next(ki)], (n_labels,), jnp.float32)
    params["output"] = (w, b)
    return params


def prepare_params(params):
    """One-time layout conversion: transposes, bias fusion, gate reordering."""
    prepared = {"embeddings": params["embeddings"], "lstm": [], "hidden": []}
    for (w_ih, w_hh, b_ih, b_hh) in params["lstm"]:
        H = w_hh.shape[1]
        # PyTorch gate row blocks: [i, f, g, o] -> reorder columns (after T) to [i, f, o, g]
        perm = jnp.concatenate([
            jnp.arange(0, H), jnp.arange(H, 2 * H),
            jnp.arange(3 * H, 4 * H), jnp.arange(2 * H, 3 * H)])
        wih_t = jnp.transpose(w_ih)[:, perm]                 # (E, 4H)
        whh_t = jnp.transpose(w_hh)[:, perm]                 # (H, 4H)
        b = (b_ih + b_hh)[perm].reshape(1, 4 * H)            # (1, 4H)
        prepared["lstm"].append((wih_t, whh_t, b))
    for (w, b) in params["hidden"]:
        prepared["hidden"].append((jnp.transpose(w), b.reshape(1, -1)))
    w, b = params["output"]
    prepared["output"] = (jnp.transpose(w), b.reshape(1, -1))
    return prepared


# ----------------------------------------------------------------------------
# Forward pass matching RNNClassifier.forward (eval semantics)
# ----------------------------------------------------------------------------
def rnn_classifier_forward(prepared, x_tokens):
    B, T = x_tokens.shape
    # Pad batch to a sublane-friendly multiple of 8; pad token id 0 has a zero
    # embedding row and padded rows are sliced off at the end.
    B_pad = ((B + 7) // 8) * 8
    if B_pad != B:
        x_tokens = jnp.pad(x_tokens, ((0, B_pad - B), (0, 0)))

    # Embedding lookup (glue: data-dependent gather in plain JAX/XLA).
    x = jnp.take(prepared["embeddings"], x_tokens, axis=0)      # (B_pad, T, E)
    x = jnp.transpose(x, (1, 0, 2)).reshape(T * B_pad, -1)       # (T*B_pad, E)

    n_layers = len(prepared["lstm"])
    for li, (wih_t, whh_t, b) in enumerate(prepared["lstm"]):
        emit_seq = li < n_layers - 1
        x = lstm_layer(x, wih_t, whh_t, b, T=T, B=B_pad, emit_sequence=emit_seq)
        # TODO(synk): inter-layer LSTM dropout (only when lstm_layers > 1) is
        # stochastic and omitted (eval semantics).

    # x is (B_pad, H): the last-timestep hidden state (== x[:, -1, :] in PyTorch).
    logits = mlp_head(x, prepared["hidden"], prepared["output"])
    return logits[:B]


# ----------------------------------------------------------------------------
# Pure-JAX reference (uses the same prepared layouts) for a correctness check.
# ----------------------------------------------------------------------------
def reference_forward(prepared, x_tokens):
    x = jnp.take(prepared["embeddings"], x_tokens, axis=0)  # (B, T, E)
    B, T, _ = x.shape
    for (wih_t, whh_t, b) in prepared["lstm"]:
        H = whh_t.shape[0]
        h = jnp.zeros((B, H), jnp.float32)
        c = jnp.zeros((B, H), jnp.float32)
        outs = []
        for t in range(T):
            gates = x[:, t, :] @ wih_t + h @ whh_t + b
            i_g = jax.nn.sigmoid(gates[:, 0 * H:1 * H])
            f_g = jax.nn.sigmoid(gates[:, 1 * H:2 * H])
            o_g = jax.nn.sigmoid(gates[:, 2 * H:3 * H])
            g_g = jnp.tanh(gates[:, 3 * H:4 * H])
            c = f_g * c + i_g * g_g
            h = o_g * jnp.tanh(c)
            outs.append(h)
        x = jnp.stack(outs, axis=1)
    h = x[:, -1, :]
    for (w, bb) in prepared["hidden"]:
        h = jnp.maximum(h @ w + bb, 0.0)
    w, bb = prepared["output"]
    return h @ w + bb


if __name__ == "__main__":
    # Small, shape-consistent config.
    VOCAB = 50
    VECTOR_SIZE = 16       # embedding dim (E)
    LSTM_FEATURES = 32     # hidden size (H); 4H = 128 lanes
    LSTM_LAYERS = 1
    HIDDEN_LAYERS = [32, 16]
    N_LABELS = 4
    BATCH = 4
    SEQ = 8

    key = jax.random.PRNGKey(0)
    k_params, k_tokens = jax.random.split(key)

    raw_params = init_params(
        k_params,
        vocab_size=VOCAB,
        vector_size=VECTOR_SIZE,
        lstm_features=LSTM_FEATURES,
        lstm_layers=LSTM_LAYERS,
        hidden_layers=HIDDEN_LAYERS,
        n_labels=N_LABELS,
    )
    prepared = prepare_params(raw_params)

    x_tokens = jax.random.randint(k_tokens, (BATCH, SEQ), 1, VOCAB, dtype=jnp.int32)

    logits = rnn_classifier_forward(prepared, x_tokens)
    jax.block_until_ready(logits)
    assert logits.shape == (BATCH, N_LABELS)

    ref = reference_forward(prepared, x_tokens)
    jax.block_until_ready(ref)
    assert jnp.allclose(logits, ref, rtol=1e-3, atol=1e-3), "mismatch vs reference"

    print("KERNEL_OK")
</pallas_src>

<mosaic_0001>
module attributes {stable_mosaic.version = 11 : i64} {
  func.func @_lstm_kernel(%arg0: i32, %arg1: memref<64x16xf32, #tpu.memory_space<vmem>>, %arg2: memref<16x128xf32, #tpu.memory_space<vmem>>, %arg3: memref<32x128xf32, #tpu.memory_space<vmem>>, %arg4: memref<1x128xf32, #tpu.memory_space<vmem>>, %arg5: memref<8x32xf32, #tpu.memory_space<vmem>>, %arg6: memref<64x128xf32, #tpu.memory_space<vmem>>) attributes {dimension_semantics = [#tpu.dimension_semantics<arbitrary>], iteration_bounds = array<i64: 1>, scalar_prefetch = 0 : i64, scratch_operands = 1 : i64, tpu.core_type = #tpu.core_type<tc>, window_params = [{pipeline_mode = #tpu.pipeline_mode<synchronous>, transform_indices = @transform_0, window_bounds = array<i64: 64, 16>}, {pipeline_mode = #tpu.pipeline_mode<synchronous>, transform_indices = @transform_1, window_bounds = array<i64: 16, 128>}, {pipeline_mode = #tpu.pipeline_mode<synchronous>, transform_indices = @transform_2, window_bounds = array<i64: 32, 128>}, {pipeline_mode = #tpu.pipeline_mode<synchronous>, transform_indices = @transform_3, window_bounds = array<i64: 1, 128>}, {pipeline_mode = #tpu.pipeline_mode<synchronous>, transform_indices = @transform_4, window_bounds = array<i64: 8, 32>}]} {
    %c0 = arith.constant 0 : index
    %c0_0 = arith.constant 0 : index
    %0 = vector.load %arg1[%c0, %c0_0] : memref<64x16xf32, #tpu.memory_space<vmem>>, vector<64x16xf32>
    %c0_1 = arith.constant 0 : index
    %c0_2 = arith.constant 0 : index
    %1 = vector.load %arg2[%c0_1, %c0_2] : memref<16x128xf32, #tpu.memory_space<vmem>>, vector<16x128xf32>
    %cst = arith.constant dense<0.000000e+00> : vector<64x128xf32>
    %2 = tpu.matmul %0, %1, %cst {dimension_numbers = #tpu.dot_dimension_numbers<[1], [0], [0], [1], [0, 0, 1, 1], [], []>} : vector<64x16xf32>, vector<16x128xf32>, vector<64x128xf32> -> vector<64x128xf32>
    %c0_3 = arith.constant 0 : index
    %c0_4 = arith.constant 0 : index
    %3 = vector.load %arg4[%c0_3, %c0_4] : memref<1x128xf32, #tpu.memory_space<vmem>>, vector<1x128xf32>
    %4 = vector.broadcast %3 : vector<1x128xf32> to vector<64x128xf32>
    %5 = arith.addf %2, %4 : vector<64x128xf32>
    %c0_5 = arith.constant 0 : index
    %c0_6 = arith.constant 0 : index
    %6 = vector.load %arg6[%c0_5, %c0_6] : memref<64x128xf32, #tpu.memory_space<vmem>>, vector<64x128xf32>
    tpu.vector_store %arg6[%c0_5, %c0_6], %5 {strides = array<i32>} : memref<64x128xf32, #tpu.memory_space<vmem>>, vector<64x128xf32>,
    %cst_7 = arith.constant 0.000000e+00 : f32
    %7 = vector.broadcast %cst_7 : f32 to vector<8x32xf32>
    %cst_8 = arith.constant 0.000000e+00 : f32
    %8 = vector.broadcast %cst_8 : f32 to vector<8x32xf32>
    %c0_i32 = arith.constant 0 : i32
    %c8_i32 = arith.constant 8 : i32
    %9 = arith.muli %c0_i32, %c8_i32 : i32
    %10 = tpu.assume_multiple %9, 8 : i32
    %11 = arith.index_cast %10 : i32 to index
    %c0_9 = arith.constant 0 : index
    %12 = vector.load %arg6[%11, %c0_9] : memref<64x128xf32, #tpu.memory_space<vmem>>, vector<8x128xf32>
    %c0_10 = arith.constant 0 : index
    %c0_11 = arith.constant 0 : index
    %13 = vector.load %arg3[%c0_10, %c0_11] : memref<32x128xf32, #tpu.memory_space<vmem>>, vector<32x128xf32>
    %cst_12 = arith.constant dense<0.000000e+00> : vector<8x128xf32>
    %14 = tpu.matmul %7, %13, %cst_12 {dimension_numbers = #tpu.dot_dimension_numbers<[1], [0], [0], [1], [0, 0, 1, 1], [], []>} : vector<8x32xf32>, vector<32x128xf32>, vector<8x128xf32> -> vector<8x128xf32>
    %15 = arith.addf %12, %14 : vector<8x128xf32>
    %16 = vector.extract_strided_slice %15 {offsets = [0, 0], sizes = [8, 96], strides = [1, 1]} : vector<8x128xf32> to vector<8x96xf32>
    %17 = arith.negf %16 : vector<8x96xf32>
    %18 = math.exp %17 : vector<8x96xf32>
    %cst_13 = arith.constant 1.000000e+00 : f32
    %19 = vector.broadcast %cst_13 : f32 to vector<8x96xf32>
    %20 = arith.addf %19, %18 : vector<8x96xf32>
    %21 = arith.divf %19, %20 : vector<8x96xf32>
    %22 = vector.extract_strided_slice %21 {offsets = [0, 0], sizes = [8, 32], strides = [1, 1]} : vector<8x96xf32> to vector<8x32xf32>
    %23 = vector.extract_strided_slice %21 {offsets = [0, 32], sizes = [8, 32], strides = [1, 1]} : vector<8x96xf32> to vector<8x32xf32>
    %24 = vector.extract_strided_slice %21 {offsets = [0, 64], sizes = [8, 32], strides = [1, 1]} : vector<8x96xf32> to vector<8x32xf32>
    %25 = vector.extract_strided_slice %15 {offsets = [0, 96], sizes = [8, 32], strides = [1, 1]} : vector<8x128xf32> to vector<8x32xf32>
    %26 = math.tanh %25 : vector<8x32xf32>
    %27 = arith.mulf %23, %8 : vector<8x32xf32>
    %28 = arith.mulf %22, %26 : vector<8x32xf32>
    %29 = arith.addf %27, %28 : vector<8x32xf32>
    %30 = math.tanh %29 : vector<8x32xf32>
    %31 = arith.mulf %24, %30 : vector<8x32xf32>
    %c1_i32 = arith.constant 1 : i32
    %c8_i32_14 = arith.constant 8 : i32
    %32 = arith.muli %c1_i32, %c8_i32_14 : i32
    %33 = tpu.assume_multiple %32, 8 : i32
    %34 = arith.index_cast %33 : i32 to index
    %c0_15 = arith.constant 0 : index
    %35 = vector.load %arg6[%34, %c0_15] : memref<64x128xf32, #tpu.memory_space<vmem>>, vector<8x128xf32>
    %c0_16 = arith.constant 0 : index
    %c0_17 = arith.constant 0 : index
    %36 = vector.load %arg3[%c0_16, %c0_17] : memref<32x128xf32, #tpu.memory_space<vmem>>, vector<32x128xf32>
    %cst_18 = arith.constant dense<0.000000e+00> : vector<8x128xf32>
    %37 = tpu.matmul %31, %36, %cst_18 {dimension_numbers = #tpu.dot_dimension_numbers<[1], [0], [0], [1], [0, 0, 1, 1], [], []>} : vector<8x32xf32>, vector<32x128xf32>, vector<8x128xf32> -> vector<8x128xf32>
    %38 = arith.addf %35, %37 : vector<8x128xf32>
    %39 = vector.extract_strided_slice %38 {offsets = [0, 0], sizes = [8, 96], strides = [1, 1]} : vector<8x128xf32> to vector<8x96xf32>
    %40 = arith.negf %39 : vector<8x96xf32>
    %41 = math.exp %40 : vector<8x96xf32>
    %cst_19 = arith.constant 1.000000e+00 : f32
    %42 = vector.broadcast %cst_19 : f32 to vector<8x96xf32>
    %43 = arith.addf %42, %41 : vector<8x96xf32>
    %44 = arith.divf %42, %43 : vector<8x96xf32>
    %45 = vector.extract_strided_slice %44 {offsets = [0, 0], sizes = [8, 32], strides = [1, 1]} : vector<8x96xf32> to vector<8x32xf32>
    %46 = vector.extract_strided_slice %44 {offsets = [0, 32], sizes = [8, 32], strides = [1, 1]} : vector<8x96xf32> to vector<8x32xf32>
    %47 = vector.extract_strided_slice %44 {offsets = [0, 64], sizes = [8, 32], strides = [1, 1]} : vector<8x96xf32> to vector<8x32xf32>
    %48 = vector.extract_strided_slice %38 {offsets = [0, 96], sizes = [8, 32], strides = [1, 1]} : vector<8x128xf32> to vector<8x32xf32>
    %49 = math.tanh %48 : vector<8x32xf32>
    %50 = arith.mulf %46, %29 : vector<8x32xf32>
    %51 = arith.mulf %45, %49 : vector<8x32xf32>
    %52 = arith.addf %50, %51 : vector<8x32xf32>
    %53 = math.tanh %52 : vector<8x32xf32>
    %54 = arith.mulf %47, %53 : vector<8x32xf32>
    %c2_i32 = arith.constant 2 : i32
    %c8_i32_20 = arith.constant 8 : i32
    %55 = arith.muli %c2_i32, %c8_i32_20 : i32
    %56 = tpu.assume_multiple %55, 8 : i32
    %57 = arith.index_cast %56 : i32 to index
    %c0_21 = arith.constant 0 : index
    %58 = vector.load %arg6[%57, %c0_21] : memref<64x128xf32, #tpu.memory_space<vmem>>, vector<8x128xf32>
    %c0_22 = arith.constant 0 : index
    %c0_23 = arith.constant 0 : index
    %59 = vector.load %arg3[%c0_22, %c0_23] : memref<32x128xf32, #tpu.memory_space<vmem>>, vector<32x128xf32>
    %cst_24 = arith.constant dense<0.000000e+00> : vector<8x128xf32>
    %60 = tpu.matmul %54, %59, %cst_24 {dimension_numbers = #tpu.dot_dimension_numbers<[1], [0], [0], [1], [0, 0, 1, 1], [], []>} : vector<8x32xf32>, vector<32x128xf32>, vector<8x128xf32> -> vector<8x128xf32>
    %61 = arith.addf %58, %60 : vector<8x128xf32>
    %62 = vector.extract_strided_slice %61 {offsets = [0, 0], sizes = [8, 96], strides = [1, 1]} : vector<8x128xf32> to vector<8x96xf32>
    %63 = arith.negf %62 : vector<8x96xf32>
    %64 = math.exp %63 : vector<8x96xf32>
    %cst_25 = arith.constant 1.000000e+00 : f32
    %65 = vector.broadcast %cst_25 : f32 to vector<8x96xf32>
    %66 = arith.addf %65, %64 : vector<8x96xf32>
    %67 = arith.divf %65, %66 : vector<8x96xf32>
    %68 = vector.extract_strided_slice %67 {offsets = [0, 0], sizes = [8, 32], strides = [1, 1]} : vector<8x96xf32> to vector<8x32xf32>
    %69 = vector.extract_strided_slice %67 {offsets = [0, 32], sizes = [8, 32], strides = [1, 1]} : vector<8x96xf32> to vector<8x32xf32>
    %70 = vector.extract_strided_slice %67 {offsets = [0, 64], sizes = [8, 32], strides = [1, 1]} : vector<8x96xf32> to vector<8x32xf32>
    %71 = vector.extract_strided_slice %61 {offsets = [0, 96], sizes = [8, 32], strides = [1, 1]} : vector<8x128xf32> to vector<8x32xf32>
    %72 = math.tanh %71 : vector<8x32xf32>
    %73 = arith.mulf %69, %52 : vector<8x32xf32>
    %74 = arith.mulf %68, %72 : vector<8x32xf32>
    %75 = arith.addf %73, %74 : vector<8x32xf32>
    %76 = math.tanh %75 : vector<8x32xf32>
    %77 = arith.mulf %70, %76 : vector<8x32xf32>
    %c3_i32 = arith.constant 3 : i32
    %c8_i32_26 = arith.constant 8 : i32
    %78 = arith.muli %c3_i32, %c8_i32_26 : i32
    %79 = tpu.assume_multiple %78, 8 : i32
    %80 = arith.index_cast %79 : i32 to index
    %c0_27 = arith.constant 0 : index
    %81 = vector.load %arg6[%80, %c0_27] : memref<64x128xf32, #tpu.memory_space<vmem>>, vector<8x128xf32>
    %c0_28 = arith.constant 0 : index
    %c0_29 = arith.constant 0 : index
    %82 = vector.load %arg3[%c0_28, %c0_29] : memref<32x128xf32, #tpu.memory_space<vmem>>, vector<32x128xf32>
    %cst_30 = arith.constant dense<0.000000e+00> : vector<8x128xf32>
    %83 = tpu.matmul %77, %82, %cst_30 {dimension_numbers = #tpu.dot_dimension_numbers<[1], [0], [0], [1], [0, 0, 1, 1], [], []>} : vector<8x32xf32>, vector<32x128xf32>, vector<8x128xf32> -> vector<8x128xf32>
    %84 = arith.addf %81, %83 : vector<8x128xf32>
    %85 = vector.extract_strided_slice %84 {offsets = [0, 0], sizes = [8, 96], strides = [1, 1]} : vector<8x128xf32> to vector<8x96xf32>
    %86 = arith.negf %85 : vector<8x96xf32>
    %87 = math.exp %86 : vector<8x96xf32>
    %cst_31 = arith.constant 1.000000e+00 : f32
    %88 = vector.broadcast %cst_31 : f32 to vector<8x96xf32>
    %89 = arith.addf %88, %87 : vector<8x96xf32>
    %90 = arith.divf %88, %89 : vector<8x96xf32>
    %91 = vector.extract_strided_slice %90 {offsets = [0, 0], sizes = [8, 32], strides = [1, 1]} : vector<8x96xf32> to vector<8x32xf32>
    %92 = vector.extract_strided_slice %90 {offsets = [0, 32], sizes = [8, 32], strides = [1, 1]} : vector<8x96xf32> to vector<8x32xf32>
    %93 = vector.extract_strided_slice %90 {offsets = [0, 64], sizes = [8, 32], strides = [1, 1]} : vector<8x96xf32> to vector<8x32xf32>
    %94 = vector.extract_strided_slice %84 {offsets = [0, 96], sizes = [8, 32], strides = [1, 1]} : vector<8x128xf32> to vector<8x32xf32>
    %95 = math.tanh %94 : vector<8x32xf32>
    %96 = arith.mulf %92, %75 : vector<8x32xf32>
    %97 = arith.mulf %91, %95 : vector<8x32xf32>
    %98 = arith.addf %96, %97 : vector<8x32xf32>
    %99 = math.tanh %98 : vector<8x32xf32>
    %100 = arith.mulf %93, %99 : vector<8x32xf32>
    %c4_i32 = arith.constant 4 : i32
    %c8_i32_32 = arith.constant 8 : i32
    %101 = arith.muli %c4_i32, %c8_i32_32 : i32
    %102 = tpu.assume_multiple %101, 8 : i32
    %103 = arith.index_cast %102 : i32 to index
    %c0_33 = arith.constant 0 : index
    %104 = vector.load %arg6[%103, %c0_33] : memref<64x128xf32, #tpu.memory_space<vmem>>, vector<8x128xf32>
    %c0_34 = arith.constant 0 : index
    %c0_35 = arith.constant 0 : index
    %105 = vector.load %arg3[%c0_34, %c0_35] : memref<32x128xf32, #tpu.memory_space<vmem>>, vector<32x128xf32>
    %cst_36 = arith.constant dense<0.000000e+00> : vector<8x128xf32>
    %106 = tpu.matmul %100, %105, %cst_36 {dimension_numbers = #tpu.dot_dimension_numbers<[1], [0], [0], [1], [0, 0, 1, 1], [], []>} : vector<8x32xf32>, vector<32x128xf32>, vector<8x128xf32> -> vector<8x128xf32>
    %107 = arith.addf %104, %106 : vector<8x128xf32>
    %108 = vector.extract_strided_slice %107 {offsets = [0, 0], sizes = [8, 96], strides = [1, 1]} : vector<8x128xf32> to vector<8x96xf32>
    %109 = arith.negf %108 : vector<8x96xf32>
    %110 = math.exp %109 : vector<8x96xf32>
    %cst_37 = arith.constant 1.000000e+00 : f32
    %111 = vector.broadcast %cst_37 : f32 to vector<8x96xf32>
    %112 = arith.addf %111, %110 : vector<8x96xf32>
    %113 = arith.divf %111, %112 : vector<8x96xf32>
    %114 = vector.extract_strided_slice %113 {offsets = [0, 0], sizes = [8, 32], strides = [1, 1]} : vector<8x96xf32> to vector<8x32xf32>
    %115 = vector.extract_strided_slice %113 {offsets = [0, 32], sizes = [8, 32], strides = [1, 1]} : vector<8x96xf32> to vector<8x32xf32>
    %116 = vector.extract_strided_slice %113 {offsets = [0, 64], sizes = [8, 32], strides = [1, 1]} : vector<8x96xf32> to vector<8x32xf32>
    %117 = vector.extract_strided_slice %107 {offsets = [0, 96], sizes = [8, 32], strides = [1, 1]} : vector<8x128xf32> to vector<8x32xf32>
    %118 = math.tanh %117 : vector<8x32xf32>
    %119 = arith.mulf %115, %98 : vector<8x32xf32>
    %120 = arith.mulf %114, %118 : vector<8x32xf32>
    %121 = arith.addf %119, %120 : vector<8x32xf32>
    %122 = math.tanh %121 : vector<8x32xf32>
    %123 = arith.mulf %116, %122 : vector<8x32xf32>
    %c5_i32 = arith.constant 5 : i32
    %c8_i32_38 = arith.constant 8 : i32
    %124 = arith.muli %c5_i32, %c8_i32_38 : i32
    %125 = tpu.assume_multiple %124, 8 : i32
    %126 = arith.index_cast %125 : i32 to index
    %c0_39 = arith.constant 0 : index
    %127 = vector.load %arg6[%126, %c0_39] : memref<64x128xf32, #tpu.memory_space<vmem>>, vector<8x128xf32>
    %c0_40 = arith.constant 0 : index
    %c0_41 = arith.constant 0 : index
    %128 = vector.load %arg3[%c0_40, %c0_41] : memref<32x128xf32, #tpu.memory_space<vmem>>, vector<32x128xf32>
    %cst_42 = arith.constant dense<0.000000e+00> : vector<8x128xf32>
    %129 = tpu.matmul %123, %128, %cst_42 {dimension_numbers = #tpu.dot_dimension_numbers<[1], [0], [0], [1], [0, 0, 1, 1], [], []>} : vector<8x32xf32>, vector<32x128xf32>, vector<8x128xf32> -> vector<8x128xf32>
    %130 = arith.addf %127, %129 : vector<8x128xf32>
    %131 = vector.extract_strided_slice %130 {offsets = [0, 0], sizes = [8, 96], strides = [1, 1]} : vector<8x128xf32> to vector<8x96xf32>
    %132 = arith.negf %131 : vector<8x96xf32>
    %133 = math.exp %132 : vector<8x96xf32>
    %cst_43 = arith.constant 1.000000e+00 : f32
    %134 = vector.broadcast %cst_43 : f32 to vector<8x96xf32>
    %135 = arith.addf %134, %133 : vector<8x96xf32>
    %136 = arith.divf %134, %135 : vector<8x96xf32>
    %137 = vector.extract_strided_slice %136 {offsets = [0, 0], sizes = [8, 32], strides = [1, 1]} : vector<8x96xf32> to vector<8x32xf32>
    %138 = vector.extract_strided_slice %136 {offsets = [0, 32], sizes = [8, 32], strides = [1, 1]} : vector<8x96xf32> to vector<8x32xf32>
    %139 = vector.extract_strided_slice %136 {offsets = [0, 64], sizes = [8, 32], strides = [1, 1]} : vector<8x96xf32> to vector<8x32xf32>
    %140 = vector.extract_strided_slice %130 {offsets = [0, 96], sizes = [8, 32], strides = [1, 1]} : vector<8x128xf32> to vector<8x32xf32>
    %141 = math.tanh %140 : vector<8x32xf32>
    %142 = arith.mulf %138, %121 : vector<8x32xf32>
    %143 = arith.mulf %137, %141 : vector<8x32xf32>
    %144 = arith.addf %142, %143 : vector<8x32xf32>
    %145 = math.tanh %144 : vector<8x32xf32>
    %146 = arith.mulf %139, %145 : vector<8x32xf32>
    %c6_i32 = arith.constant 6 : i32
    %c8_i32_44 = arith.constant 8 : i32
    %147 = arith.muli %c6_i32, %c8_i32_44 : i32
    %148 = tpu.assume_multiple %147, 8 : i32
    %149 = arith.index_cast %148 : i32 to index
    %c0_45 = arith.constant 0 : index
    %150 = vector.load %arg6[%149, %c0_45] : memref<64x128xf32, #tpu.memory_space<vmem>>, vector<8x128xf32>
    %c0_46 = arith.constant 0 : index
    %c0_47 = arith.constant 0 : index
    %151 = vector.load %arg3[%c0_46, %c0_47] : memref<32x128xf32, #tpu.memory_space<vmem>>, vector<32x128xf32>
    %cst_48 = arith.constant dense<0.000000e+00> : vector<8x128xf32>
    %152 = tpu.matmul %146, %151, %cst_48 {dimension_numbers = #tpu.dot_dimension_numbers<[1], [0], [0], [1], [0, 0, 1, 1], [], []>} : vector<8x32xf32>, vector<32x128xf32>, vector<8x128xf32> -> vector<8x128xf32>
    %153 = arith.addf %150, %152 : vector<8x128xf32>
    %154 = vector.extract_strided_slice %153 {offsets = [0, 0], sizes = [8, 96], strides = [1, 1]} : vector<8x128xf32> to vector<8x96xf32>
    %155 = arith.negf %154 : vector<8x96xf32>
    %156 = math.exp %155 : vector<8x96xf32>
    %cst_49 = arith.constant 1.000000e+00 : f32
    %157 = vector.broadcast %cst_49 : f32 to vector<8x96xf32>
    %158 = arith.addf %157, %156 : vector<8x96xf32>
    %159 = arith.divf %157, %158 : vector<8x96xf32>
    %160 = vector.extract_strided_slice %159 {offsets = [0, 0], sizes = [8, 32], strides = [1, 1]} : vector<8x96xf32> to vector<8x32xf32>
    %161 = vector.extract_strided_slice %159 {offsets = [0, 32], sizes = [8, 32], strides = [1, 1]} : vector<8x96xf32> to vector<8x32xf32>
    %162 = vector.extract_strided_slice %159 {offsets = [0, 64], sizes = [8, 32], strides = [1, 1]} : vector<8x96xf32> to vector<8x32xf32>
    %163 = vector.extract_strided_slice %153 {offsets = [0, 96], sizes = [8, 32], strides = [1, 1]} : vector<8x128xf32> to vector<8x32xf32>
    %164 = math.tanh %163 : vector<8x32xf32>
    %165 = arith.mulf %161, %144 : vector<8x32xf32>
    %166 = arith.mulf %160, %164 : vector<8x32xf32>
    %167 = arith.addf %165, %166 : vector<8x32xf32>
    %168 = math.tanh %167 : vector<8x32xf32>
    %169 = arith.mulf %162, %168 : vector<8x32xf32>
    %c7_i32 = arith.constant 7 : i32
    %c8_i32_50 = arith.constant 8 : i32
    %170 = arith.muli %c7_i32, %c8_i32_50 : i32
    %171 = tpu.assume_multiple %170, 8 : i32
    %172 = arith.index_cast %171 : i32 to index
    %c0_51 = arith.constant 0 : index
    %173 = vector.load %arg6[%172, %c0_51] : memref<64x128xf32, #tpu.memory_space<vmem>>, vector<8x128xf32>
    %c0_52 = arith.constant 0 : index
    %c0_53 = arith.constant 0 : index
    %174 = vector.load %arg3[%c0_52, %c0_53] : memref<32x128xf32, #tpu.memory_space<vmem>>, vector<32x128xf32>
    %cst_54 = arith.constant dense<0.000000e+00> : vector<8x128xf32>
    %175 = tpu.matmul %169, %174, %cst_54 {dimension_numbers = #tpu.dot_dimension_numbers<[1], [0], [0], [1], [0, 0, 1, 1], [], []>} : vector<8x32xf32>, vector<32x128xf32>, vector<8x128xf32> -> vector<8x128xf32>
    %176 = arith.addf %173, %175 : vector<8x128xf32>
    %177 = vector.extract_strided_slice %176 {offsets = [0, 0], sizes = [8, 96], strides = [1, 1]} : vector<8x128xf32> to vector<8x96xf32>
    %178 = arith.negf %177 : vector<8x96xf32>
    %179 = math.exp %178 : vector<8x96xf32>
    %cst_55 = arith.constant 1.000000e+00 : f32
    %180 = vector.broadcast %cst_55 : f32 to vector<8x96xf32>
    %181 = arith.addf %180, %179 : vector<8x96xf32>
    %182 = arith.divf %180, %181 : vector<8x96xf32>
    %183 = vector.extract_strided_slice %182 {offsets = [0, 0], sizes = [8, 32], strides = [1, 1]} : vector<8x96xf32> to vector<8x32xf32>
    %184 = vector.extract_strided_slice %182 {offsets = [0, 32], sizes = [8, 32], strides = [1, 1]} : vector<8x96xf32> to vector<8x32xf32>
    %185 = vector.extract_strided_slice %182 {offsets = [0, 64], sizes = [8, 32], strides = [1, 1]} : vector<8x96xf32> to vector<8x32xf32>
    %186 = vector.extract_strided_slice %176 {offsets = [0, 96], sizes = [8, 32], strides = [1, 1]} : vector<8x128xf32> to vector<8x32xf32>
    %187 = math.tanh %186 : vector<8x32xf32>
    %188 = arith.mulf %184, %167 : vector<8x32xf32>
    %189 = arith.mulf %183, %187 : vector<8x32xf32>
    %190 = arith.addf %188, %189 : vector<8x32xf32>
    %191 = math.tanh %190 : vector<8x32xf32>
    %192 = arith.mulf %185, %191 : vector<8x32xf32>
    %c8_i32_56 = arith.constant 8 : i32
    %c0_57 = arith.constant 0 : index
    %c0_58 = arith.constant 0 : index
    %193 = vector.load %arg5[%c0_57, %c0_58] : memref<8x32xf32, #tpu.memory_space<vmem>>, vector<8x32xf32>
    tpu.vector_store %arg5[%c0_57, %c0_58], %192 {strides = array<i32>} : memref<8x32xf32, #tpu.memory_space<vmem>>, vector<8x32xf32>,
    return
  }
  func.func @transform_0(%arg0: i32) -> (i32, i32) {
    %c0_i32 = arith.constant 0 : i32
    %c0_i32_0 = arith.constant 0 : i32
    %c0_i32_1 = arith.constant 0 : i32
    return %c0_i32, %c0_i32_0 : i32, i32
  }
  func.func @transform_1(%arg0: i32) -> (i32, i32) {
    %c0_i32 = arith.constant 0 : i32
    %c0_i32_0 = arith.constant 0 : i32
    %c0_i32_1 = arith.constant 0 : i32
    return %c0_i32, %c0_i32_0 : i32, i32
  }
  func.func @transform_2(%arg0: i32) -> (i32, i32) {
    %c0_i32 = arith.constant 0 : i32
    %c0_i32_0 = arith.constant 0 : i32
    %c0_i32_1 = arith.constant 0 : i32
    return %c0_i32, %c0_i32_0 : i32, i32
  }
  func.func @transform_3(%arg0: i32) -> (i32, i32) {
    %c0_i32 = arith.constant 0 : i32
    %c0_i32_0 = arith.constant 0 : i32
    %c0_i32_1 = arith.constant 0 : i32
    return %c0_i32, %c0_i32_0 : i32, i32
  }
  func.func @transform_4(%arg0: i32) -> (i32, i32) {
    %c0_i32 = arith.constant 0 : i32
    %c0_i32_0 = arith.constant 0 : i32
    %c0_i32_1 = arith.constant 0 : i32
    return %c0_i32, %c0_i32_0 : i32, i32
  }
}

</mosaic_0001>

<llo_original>
// kernel: tpu_custom_call.1
$region0: #{tpu_custom_call.1}
  #allocation0 [shape = 'u32[]', space=smem, size = 0x4, offset = 0x4, fixed_abs, tag = 'smem constant byte address 0x4 - core index']
  #allocation1 [shape = 'u32[72,128]{1,0:T(1,128)}', space=vmem, size = 0x9000, scoped, tag = 'internal scratch']
  #allocation2 [shape = 'f32[64,128]{1,0:T(8,128)}', space=vmem, size = 0x8000, scoped, tag = 'scratch operand']
  %s0 = inlined_call_operand.vmem [shape: f32[64,16], index: 0, kind: input, shape index: {}]
  %s1 = inlined_call_operand.vmem [shape: f32[16,128], index: 1, kind: input, shape index: {}]
  %s2 = inlined_call_operand.vmem [shape: f32[32,128], index: 2, kind: input, shape index: {}]
  %s3 = inlined_call_operand.vmem [shape: f32[1,128], index: 3, kind: input, shape index: {}]
  %s4 = inlined_call_operand.hbm [shape: f32[8,32], index: 4, kind: output, shape index: {}]
  %s5 = sld [smem:[#allocation0]]
  $region26: #{tpu_custom_call.1} parent=0
    _
  %s7 = ssub.s32 1, %s5
  %s8 = scalar_select 0, %s7, %s5
  $region1: #{tpu_custom_call.1} parent=0
    #allocation3 [shape = 'u8[4096]{0}', space=vmem, size = 0x1000, scoped, tag = 'output window, operand 0, single buffered']
    #allocation4 [shape = 's32[1]{0}', space=sflag, size = 0x4, scoped, tag = 'scoped memory for tpu_custom_call.1']
    %9 = vsyncpa [#allocation4], 0
    // Predicated region
    $region2: #{tpu_custom_call.1} parent=1 // pred_check
      _
    $region3: #{tpu_custom_call.1} parent=1 // pred_check_branch
      %11 = sbr.rel (0) target = $region5
    $region4: #{tpu_custom_call.1} parent=1 // pred_region
      _
    $region5: #{tpu_custom_call.1} parent=1 // pred_fallthru
      _
    // Predicated region
    $region6: #{tpu_custom_call.1} parent=1 // pred_check
      _
    $region7: #{tpu_custom_call.1} parent=1 // pred_check_branch
      %13 = sbr.rel (0) target = $region9
    $region8: #{tpu_custom_call.1} parent=1 // pred_region
      _
    $region9: #{tpu_custom_call.1} parent=1 // pred_fallthru
      _
    // Predicated region
    $region10: #{tpu_custom_call.1} parent=1 // pred_check
      _
    $region11: #{tpu_custom_call.1} parent=1 // pred_check_branch
      %15 = sbr.rel (0) target = $region13
    $region12: #{tpu_custom_call.1} parent=1 // pred_region
      _
    $region13: #{tpu_custom_call.1} parent=1 // pred_fallthru
      _
    // Predicated region
    $region14: #{tpu_custom_call.1} parent=1 // pred_check
      _
    $region15: #{tpu_custom_call.1} parent=1 // pred_check_branch
      %17 = sbr.rel (0) target = $region17
    $region16: #{tpu_custom_call.1} parent=1 // pred_region
      _
    $region17: #{tpu_custom_call.1} parent=1 // pred_fallthru
      _
    %v18 = vld [vmem:[%s0] sm:$0xff]
    %v19 = vld [vmem:[%s0 + $0x8] sm:$0xff]
    %v20 = vld [vmem:[%s0 + $0x10] sm:$0xff]
    %v21 = vld [vmem:[%s0 + $0x18] sm:$0xff]
    %v22 = vld [vmem:[%s0 + $0x20] sm:$0xff]
    %v23 = vld [vmem:[%s0 + $0x28] sm:$0xff]
    %v24 = vld [vmem:[%s0 + $0x30] sm:$0xff]
    %v25 = vld [vmem:[%s0 + $0x38] sm:$0xff]
    %v26 = vld [vmem:[%s1] sm:$0xff]
    %v27 = vld [vmem:[%s1 + $0x8] sm:$0xff]
    %v28 = vld [vmem:[%s3] sm:$0x1]
    %v30 = vperm.slane %v28, 0
    %vm32 = vcmask 130048
    %v34 = vsel %vm32, %v18, 0
    %v37 = vsel %vm32, %v19, 0
    %v40 = vsel %vm32, %v20, 0
    %v43 = vsel %vm32, %v21, 0
    %v46 = vsel %vm32, %v22, 0
    %v49 = vsel %vm32, %v23, 0
    %v52 = vsel %vm32, %v24, 0
    %v55 = vsel %vm32, %v25, 0
    %57 = vmatpush.msra.mxu0 0.0
    %58 = vmatpush.msra.mxu0 0.0
    %59 = vmatpush.msra.mxu0 0.0
    %60 = vmatpush.msra.mxu0 0.0
    %61 = vmatpush.msra.mxu0 0.0
    %62 = vmatpush.msra.mxu0 0.0
    %63 = vmatpush.msra.mxu0 0.0
    %64 = vmatpush.msra.mxu0 0.0
    %65 = vmatpush.msra.mxu0 0.0
    %66 = vmatpush.msra.mxu0 0.0
    %67 = vmatpush.msra.mxu0 0.0
    %68 = vmatpush.msra.mxu0 0.0
    %69 = vmatpush.msra.mxu0 0.0
    %70 = vmatpush.msra.mxu0 0.0
    %71 = vmatpush.msra.mxu0 %v27
    %72 = vmatpush.msra.mxu0 %v26
    %73 = vmatmul.f32.gmra.mxu0 %v34
    %v74 = vpop.f32.mrf.mxu0
    %v75 = vadd.f32 %v30, %v74
    %76 = vmatmul.f32.gmra.mxu0 %v37
    %v77 = vpop.f32.mrf.mxu0
    %v78 = vadd.f32 %v30, %v77
    %79 = vmatmul.f32.gmra.mxu0 %v40
    %v80 = vpop.f32.mrf.mxu0
    %v81 = vadd.f32 %v30, %v80
    %82 = vmatmul.f32.gmra.mxu0 %v43
    %v83 = vpop.f32.mrf.mxu0
    %v84 = vadd.f32 %v30, %v83
    %85 = vmatmul.f32.gmra.mxu0 %v46
    %v86 = vpop.f32.mrf.mxu0
    %v87 = vadd.f32 %v30, %v86
    %88 = vmatmul.f32.gmra.mxu0 %v49
    %v89 = vpop.f32.mrf.mxu0
    %v90 = vadd.f32 %v30, %v89
    %91 = vmatmul.f32.gmra.mxu0 %v52
    %v92 = vpop.f32.mrf.mxu0
    %v93 = vadd.f32 %v30, %v92
    %94 = vmatmul.f32.gmra.mxu0 %v55
    %v95 = vpop.f32.mrf.mxu0
    %v96 = vadd.f32 %v30, %v95
    %97 = vdwg.mxu0
    %98 = vst [vmem:[#allocation2] sm:$0xff] %v75
    %99 = vst [vmem:[#allocation2 + $0x8] sm:$0xff] %v78
    %100 = vst [vmem:[#allocation2 + $0x10] sm:$0xff] %v81
    %101 = vst [vmem:[#allocation2 + $0x18] sm:$0xff] %v84
    %102 = vst [vmem:[#allocation2 + $0x20] sm:$0xff] %v87
    %103 = vst [vmem:[#allocation2 + $0x28] sm:$0xff] %v90
    %104 = vst [vmem:[#allocation2 + $0x30] sm:$0xff] %v93
    %105 = vst [vmem:[#allocation2 + $0x38] sm:$0xff] %v96
    %v106 = vld [vmem:[#allocation2] sm:$0xff]
    %v107 = vld [vmem:[%s2] sm:$0xff]
    %v108 = vld [vmem:[%s2 + $0x8] sm:$0xff]
    %v109 = vld [vmem:[%s2 + $0x10] sm:$0xff]
    %v110 = vld [vmem:[%s2 + $0x18] sm:$0xff]
    %vm111 = vcmask 261120
    %v113 = vsel %vm111, 0.0, 0
    %115 = vmatpush.msra.mxu0 0.0
    %116 = vmatpush.msra.mxu0 0.0
    %117 = vmatpush.msra.mxu0 0.0
    %118 = vmatpush.msra.mxu0 0.0
    %119 = vmatpush.msra.mxu0 0.0
    %120 = vmatpush.msra.mxu0 0.0
    %121 = vmatpush.msra.mxu0 0.0
    %122 = vmatpush.msra.mxu0 0.0
    %123 = vmatpush.msra.mxu0 0.0
    %124 = vmatpush.msra.mxu0 0.0
    %125 = vmatpush.msra.mxu0 0.0
    %126 = vmatpush.msra.mxu0 0.0
    %127 = vmatpush.msra.mxu0 %v110
    %128 = vmatpush.msra.mxu0 %v109
    %129 = vmatpush.msra.mxu0 %v108
    %130 = vmatpush.msra.mxu0 %v107
    %131 = vmatmul.f32.gmra.mxu0 %v113
    %v132 = vpop.f32.mrf.mxu0
    %v133 = vadd.f32 0.0, %v132
    %134 = vdwg.mxu0
    %v135 = vadd.f32 %v106, %v133
    %v136 = vxor.u32 %v135, 2147483648
    %v137 = vmul.f32 %v136, 1.442695
    %v138 = vpow.pop %v137
    %v139 = vadd.f32 %v138, 1.0
    %v140 = vrcp.pop %v139
    %v141 = vmul.f32 %v139, %v140
    %v142 = vsub.f32 1.0, %v141
    %v143 = vmul.f32 %v140, %v142
    %v144 = vadd.f32 %v140, %v143
    %vm145 = vweird.f32 %v139
    %vm146 = vweird.f32 %v140
    %vm147 = vmor %vm145, %vm146
    %v148 = vsel %vm147, %v140, %v144
    %v149 = vand.u32 2147483647, %v139
    %vm150 = vcmp.eq.f32.partialorder %v149, 8.507059e+37
    %v151 = vand.u32 %v139, 2147483648
    %v152 = vor.u32 1.1754944e-38, %v151
    %v153 = vsel %vm150, %v152, %v148
    %v154 = vmul.f32 1.0, %v153
    %v155 = vtanh.pop %v135
    %v156 = vmul.f32 %v154, 0.0
    %158 = vrot.lane.b32.xlu0 %v155, 32
    %v159 = vpop.permute.xlu0 %158
    %v161 = vmul.f32 %v154, %v159
    %163 = vrot.lane.b32.xlu0 %v161, 32
    %v164 = vpop.permute.xlu0 %163
    %v166 = vadd.f32 %v156, %v164
    %v167 = vtanh.pop %v166
    %169 = vrot.lane.b32.xlu0 %v167, 32
    %v170 = vpop.permute.xlu0 %169
    %v172 = vmul.f32 %v154, %v170
    %s173 = scalar_lea.vmem [#allocation2], 8
    %v174 = vld [vmem:[%s173] sm:$0xff]
    %176 = vrot.lane.b32.xlu0 %v172, 64
    %v177 = vpop.permute.xlu0 %176
    %v178 = vsel %vm111, %v177, 0
    %180 = vmatpush.msra.mxu0 0.0
    %181 = vmatpush.msra.mxu0 0.0
    %182 = vmatpush.msra.mxu0 0.0
    %183 = vmatpush.msra.mxu0 0.0
    %184 = vmatpush.msra.mxu0 0.0
    %185 = vmatpush.msra.mxu0 0.0
    %186 = vmatpush.msra.mxu0 0.0
    %187 = vmatpush.msra.mxu0 0.0
    %188 = vmatpush.msra.mxu0 0.0
    %189 = vmatpush.msra.mxu0 0.0
    %190 = vmatpush.msra.mxu0 0.0
    %191 = vmatpush.msra.mxu0 0.0
    %192 = vmatpush.msra.mxu0 %v110
    %193 = vmatpush.msra.mxu0 %v109
    %194 = vmatpush.msra.mxu0 %v108
    %195 = vmatpush.msra.mxu0 %v107
    %196 = vmatmul.f32.gmra.mxu0 %v178
    %v197 = vpop.f32.mrf.mxu0
    %v198 = vadd.f32 0.0, %v197
    %199 = vdwg.mxu0
    %v200 = vadd.f32 %v174, %v198
    %v201 = vxor.u32 %v200, 2147483648
    %v202 = vmul.f32 %v201, 1.442695
    %v203 = vpow.pop %v202
    %v204 = vadd.f32 %v203, 1.0
    %v205 = vrcp.pop %v204
    %v206 = vmul.f32 %v204, %v205
    %v207 = vsub.f32 1.0, %v206
    %v208 = vmul.f32 %v205, %v207
    %v209 = vadd.f32 %v205, %v208
    %vm210 = vweird.f32 %v204
    %vm211 = vweird.f32 %v205
    %vm212 = vmor %vm210, %vm211
    %v213 = vsel %vm212, %v205, %v209
    %v214 = vand.u32 2147483647, %v204
    %vm215 = vcmp.eq.f32.partialorder %v214, 8.507059e+37
    %v216 = vand.u32 %v204, 2147483648
    %v217 = vor.u32 1.1754944e-38, %v216
    %v218 = vsel %vm215, %v217, %v213
    %v219 = vmul.f32 1.0, %v218
    %v220 = vtanh.pop %v200
    %v221 = vmul.f32 %v219, %v166
    %223 = vrot.lane.b32.xlu0 %v220, 32
    %v224 = vpop.permute.xlu0 %223
    %v226 = vmul.f32 %v219, %v224
    %228 = vrot.lane.b32.xlu0 %v226, 32
    %v229 = vpop.permute.xlu0 %228
    %v231 = vadd.f32 %v221, %v229
    %v232 = vtanh.pop %v231
    %234 = vrot.lane.b32.xlu0 %v232, 32
    %v235 = vpop.permute.xlu0 %234
    %v237 = vmul.f32 %v219, %v235
    %s238 = scalar_lea.vmem [#allocation2], 16
    %v239 = vld [vmem:[%s238] sm:$0xff]
    %241 = vrot.lane.b32.xlu0 %v237, 64
    %v242 = vpop.permute.xlu0 %241
    %v243 = vsel %vm111, %v242, 0
    %245 = vmatpush.msra.mxu0 0.0
    %246 = vmatpush.msra.mxu0 0.0
    %247 = vmatpush.msra.mxu0 0.0
    %248 = vmatpush.msra.mxu0 0.0
    %249 = vmatpush.msra.mxu0 0.0
    %250 = vmatpush.msra.mxu0 0.0
    %251 = vmatpush.msra.mxu0 0.0
    %252 = vmatpush.msra.mxu0 0.0
    %253 = vmatpush.msra.mxu0 0.0
    %254 = vmatpush.msra.mxu0 0.0
    %255 = vmatpush.msra.mxu0 0.0
    %256 = vmatpush.msra.mxu0 0.0
    %257 = vmatpush.msra.mxu0 %v110
    %258 = vmatpush.msra.mxu0 %v109
    %259 = vmatpush.msra.mxu0 %v108
    %260 = vmatpush.msra.mxu0 %v107
    %261 = vmatmul.f32.gmra.mxu0 %v243
    %v262 = vpop.f32.mrf.mxu0
    %v263 = vadd.f32 0.0, %v262
    %264 = vdwg.mxu0
    %v265 = vadd.f32 %v239, %v263
    %v266 = vxor.u32 %v265, 2147483648
    %v267 = vmul.f32 %v266, 1.442695
    %v268 = vpow.pop %v267
    %v269 = vadd.f32 %v268, 1.0
    %v270 = vrcp.pop %v269
    %v271 = vmul.f32 %v269, %v270
    %v272 = vsub.f32 1.0, %v271
    %v273 = vmul.f32 %v270, %v272
    %v274 = vadd.f32 %v270, %v273
    %vm275 = vweird.f32 %v269
    %vm276 = vweird.f32 %v270
    %vm277 = vmor %vm275, %vm276
    %v278 = vsel %vm277, %v270, %v274
    %v279 = vand.u32 2147483647, %v269
    %vm280 = vcmp.eq.f32.partialorder %v279, 8.507059e+37
    %v281 = vand.u32 %v269, 2147483648
    %v282 = vor.u32 1.1754944e-38, %v281
    %v283 = vsel %vm280, %v282, %v278
    %v284 = vmul.f32 1.0, %v283
    %v285 = vtanh.pop %v265
    %v286 = vmul.f32 %v284, %v231
    %288 = vrot.lane.b32.xlu0 %v285, 32
    %v289 = vpop.permute.xlu0 %288
    %v291 = vmul.f32 %v284, %v289
    %293 = vrot.lane.b32.xlu0 %v291, 32
    %v294 = vpop.permute.xlu0 %293
    %v296 = vadd.f32 %v286, %v294
    %v297 = vtanh.pop %v296
    %299 = vrot.lane.b32.xlu0 %v297, 32
    %v300 = vpop.permute.xlu0 %299
    %v302 = vmul.f32 %v284, %v300
    %s303 = scalar_lea.vmem [#allocation2], 24
    %v304 = vld [vmem:[%s303] sm:$0xff]
    %306 = vrot.lane.b32.xlu0 %v302, 64
    %v307 = vpop.permute.xlu0 %306
    %v308 = vsel %vm111, %v307, 0
    %310 = vmatpush.msra.mxu0 0.0
    %311 = vmatpush.msra.mxu0 0.0
    %312 = vmatpush.msra.mxu0 0.0
    %313 = vmatpush.msra.mxu0 0.0
    %314 = vmatpush.msra.mxu0 0.0
    %315 = vmatpush.msra.mxu0 0.0
    %316 = vmatpush.msra.mxu0 0.0
    %317 = vmatpush.msra.mxu0 0.0
    %318 = vmatpush.msra.mxu0 0.0
    %319 = vmatpush.msra.mxu0 0.0
    %320 = vmatpush.msra.mxu0 0.0
    %321 = vmatpush.msra.mxu0 0.0
    %322 = vmatpush.msra.mxu0 %v110
    %323 = vmatpush.msra.mxu0 %v109
    %324 = vmatpush.msra.mxu0 %v108
    %325 = vmatpush.msra.mxu0 %v107
    %326 = vmatmul.f32.gmra.mxu0 %v308
    %v327 = vpop.f32.mrf.mxu0
    %v328 = vadd.f32 0.0, %v327
    %329 = vdwg.mxu0
    %v330 = vadd.f32 %v304, %v328
    %v331 = vxor.u32 %v330, 2147483648
    %v332 = vmul.f32 %v331, 1.442695
    %v333 = vpow.pop %v332
    %v334 = vadd.f32 %v333, 1.0
    %v335 = vrcp.pop %v334
    %v336 = vmul.f32 %v334, %v335
    %v337 = vsub.f32 1.0, %v336
    %v338 = vmul.f32 %v335, %v337
    %v339 = vadd.f32 %v335, %v338
    %vm340 = vweird.f32 %v334
    %vm341 = vweird.f32 %v335
    %vm342 = vmor %vm340, %vm341
    %v343 = vsel %vm342, %v335, %v339
    %v344 = vand.u32 2147483647, %v334
    %vm345 = vcmp.eq.f32.partialorder %v344, 8.507059e+37
    %v346 = vand.u32 %v334, 2147483648
    %v347 = vor.u32 1.1754944e-38, %v346
    %v348 = vsel %vm345, %v347, %v343
    %v349 = vmul.f32 1.0, %v348
    %v350 = vtanh.pop %v330
    %v351 = vmul.f32 %v349, %v296
    %353 = vrot.lane.b32.xlu0 %v350, 32
    %v354 = vpop.permute.xlu0 %353
    %v356 = vmul.f32 %v349, %v354
    %358 = vrot.lane.b32.xlu0 %v356, 32
    %v359 = vpop.permute.xlu0 %358
    %v361 = vadd.f32 %v351, %v359
    %v362 = vtanh.pop %v361
    %364 = vrot.lane.b32.xlu0 %v362, 32
    %v365 = vpop.permute.xlu0 %364
    %v367 = vmul.f32 %v349, %v365
    %s368 = scalar_lea.vmem [#allocation2], 32
    %v369 = vld [vmem:[%s368] sm:$0xff]
    %371 = vrot.lane.b32.xlu0 %v367, 64
    %v372 = vpop.permute.xlu0 %371
    %v373 = vsel %vm111, %v372, 0
    %375 = vmatpush.msra.mxu0 0.0
    %376 = vmatpush.msra.mxu0 0.0
    %377 = vmatpush.msra.mxu0 0.0
    %378 = vmatpush.msra.mxu0 0.0
    %379 = vmatpush.msra.mxu0 0.0
    %380 = vmatpush.msra.mxu0 0.0
    %381 = vmatpush.msra.mxu0 0.0
    %382 = vmatpush.msra.mxu0 0.0
    %383 = vmatpush.msra.mxu0 0.0
    %384 = vmatpush.msra.mxu0 0.0
    %385 = vmatpush.msra.mxu0 0.0
    %386 = vmatpush.msra.mxu0 0.0
    %387 = vmatpush.msra.mxu0 %v110
    %388 = vmatpush.msra.mxu0 %v109
    %389 = vmatpush.msra.mxu0 %v108
    %390 = vmatpush.msra.mxu0 %v107
    %391 = vmatmul.f32.gmra.mxu0 %v373
    %v392 = vpop.f32.mrf.mxu0
    %v393 = vadd.f32 0.0, %v392
    %394 = vdwg.mxu0
    %v395 = vadd.f32 %v369, %v393
    %v396 = vxor.u32 %v395, 2147483648
    %v397 = vmul.f32 %v396, 1.442695
    %v398 = vpow.pop %v397
    %v399 = vadd.f32 %v398, 1.0
    %v400 = vrcp.pop %v399
    %v401 = vmul.f32 %v399, %v400
    %v402 = vsub.f32 1.0, %v401
    %v403 = vmul.f32 %v400, %v402
    %v404 = vadd.f32 %v400, %v403
    %vm405 = vweird.f32 %v399
    %vm406 = vweird.f32 %v400
    %vm407 = vmor %vm405, %vm406
    %v408 = vsel %vm407, %v400, %v404
    %v409 = vand.u32 2147483647, %v399
    %vm410 = vcmp.eq.f32.partialorder %v409, 8.507059e+37
    %v411 = vand.u32 %v399, 2147483648
    %v412 = vor.u32 1.1754944e-38, %v411
    %v413 = vsel %vm410, %v412, %v408
    %v414 = vmul.f32 1.0, %v413
    %v415 = vtanh.pop %v395
    %v416 = vmul.f32 %v414, %v361
    %418 = vrot.lane.b32.xlu0 %v415, 32
    %v419 = vpop.permute.xlu0 %418
    %v421 = vmul.f32 %v414, %v419
    %423 = vrot.lane.b32.xlu0 %v421, 32
    %v424 = vpop.permute.xlu0 %423
    %v426 = vadd.f32 %v416, %v424
    %v427 = vtanh.pop %v426
    %429 = vrot.lane.b32.xlu0 %v427, 32
    %v430 = vpop.permute.xlu0 %429
    %v432 = vmul.f32 %v414, %v430
    %s433 = scalar_lea.vmem [#allocation2], 40
    %v434 = vld [vmem:[%s433] sm:$0xff]
    %436 = vrot.lane.b32.xlu0 %v432, 64
    %v437 = vpop.permute.xlu0 %436
    %v438 = vsel %vm111, %v437, 0
    %440 = vmatpush.msra.mxu0 0.0
    %441 = vmatpush.msra.mxu0 0.0
    %442 = vmatpush.msra.mxu0 0.0
    %443 = vmatpush.msra.mxu0 0.0
    %444 = vmatpush.msra.mxu0 0.0
    %445 = vmatpush.msra.mxu0 0.0
    %446 = vmatpush.msra.mxu0 0.0
    %447 = vmatpush.msra.mxu0 0.0
    %448 = vmatpush.msra.mxu0 0.0
    %449 = vmatpush.msra.mxu0 0.0
    %450 = vmatpush.msra.mxu0 0.0
    %451 = vmatpush.msra.mxu0 0.0
    %452 = vmatpush.msra.mxu0 %v110
    %453 = vmatpush.msra.mxu0 %v109
    %454 = vmatpush.msra.mxu0 %v108
    %455 = vmatpush.msra.mxu0 %v107
    %456 = vmatmul.f32.gmra.mxu0 %v438
    %v457 = vpop.f32.mrf.mxu0
    %v458 = vadd.f32 0.0, %v457
    %459 = vdwg.mxu0
    %v460 = vadd.f32 %v434, %v458
    %v461 = vxor.u32 %v460, 2147483648
    %v462 = vmul.f32 %v461, 1.442695
    %v463 = vpow.pop %v462
    %v464 = vadd.f32 %v463, 1.0
    %v465 = vrcp.pop %v464
    %v466 = vmul.f32 %v464, %v465
    %v467 = vsub.f32 1.0, %v466
    %v468 = vmul.f32 %v465, %v467
    %v469 = vadd.f32 %v465, %v468
    %vm470 = vweird.f32 %v464
    %vm471 = vweird.f32 %v465
    %vm472 = vmor %vm470, %vm471
    %v473 = vsel %vm472, %v465, %v469
    %v474 = vand.u32 2147483647, %v464
    %vm475 = vcmp.eq.f32.partialorder %v474, 8.507059e+37
    %v476 = vand.u32 %v464, 2147483648
    %v477 = vor.u32 1.1754944e-38, %v476
    %v478 = vsel %vm475, %v477, %v473
    %v479 = vmul.f32 1.0, %v478
    %v480 = vtanh.pop %v460
    %v481 = vmul.f32 %v479, %v426
    %483 = vrot.lane.b32.xlu0 %v480, 32
    %v484 = vpop.permute.xlu0 %483
    %v486 = vmul.f32 %v479, %v484
    %488 = vrot.lane.b32.xlu0 %v486, 32
    %v489 = vpop.permute.xlu0 %488
    %v491 = vadd.f32 %v481, %v489
    %v492 = vtanh.pop %v491
    %494 = vrot.lane.b32.xlu0 %v492, 32
    %v495 = vpop.permute.xlu0 %494
    %v497 = vmul.f32 %v479, %v495
    %s498 = scalar_lea.vmem [#allocation2], 48
    %v499 = vld [vmem:[%s498] sm:$0xff]
    %501 = vrot.lane.b32.xlu0 %v497, 64
    %v502 = vpop.permute.xlu0 %501
    %v503 = vsel %vm111, %v502, 0
    %505 = vmatpush.msra.mxu0 0.0
    %506 = vmatpush.msra.mxu0 0.0
    %507 = vmatpush.msra.mxu0 0.0
    %508 = vmatpush.msra.mxu0 0.0
    %509 = vmatpush.msra.mxu0 0.0
    %510 = vmatpush.msra.mxu0 0.0
    %511 = vmatpush.msra.mxu0 0.0
    %512 = vmatpush.msra.mxu0 0.0
    %513 = vmatpush.msra.mxu0 0.0
    %514 = vmatpush.msra.mxu0 0.0
    %515 = vmatpush.msra.mxu0 0.0
    %516 = vmatpush.msra.mxu0 0.0
    %517 = vmatpush.msra.mxu0 %v110
    %518 = vmatpush.msra.mxu0 %v109
    %519 = vmatpush.msra.mxu0 %v108
    %520 = vmatpush.msra.mxu0 %v107
    %521 = vmatmul.f32.gmra.mxu0 %v503
    %v522 = vpop.f32.mrf.mxu0
    %v523 = vadd.f32 0.0, %v522
    %524 = vdwg.mxu0
    %v525 = vadd.f32 %v499, %v523
    %v526 = vxor.u32 %v525, 2147483648
    %v527 = vmul.f32 %v526, 1.442695
    %v528 = vpow.pop %v527
    %v529 = vadd.f32 %v528, 1.0
    %v530 = vrcp.pop %v529
    %v531 = vmul.f32 %v529, %v530
    %v532 = vsub.f32 1.0, %v531
    %v533 = vmul.f32 %v530, %v532
    %v534 = vadd.f32 %v530, %v533
    %vm535 = vweird.f32 %v529
    %vm536 = vweird.f32 %v530
    %vm537 = vmor %vm535, %vm536
    %v538 = vsel %vm537, %v530, %v534
    %v539 = vand.u32 2147483647, %v529
    %vm540 = vcmp.eq.f32.partialorder %v539, 8.507059e+37
    %v541 = vand.u32 %v529, 2147483648
    %v542 = vor.u32 1.1754944e-38, %v541
    %v543 = vsel %vm540, %v542, %v538
    %v544 = vmul.f32 1.0, %v543
    %v545 = vtanh.pop %v525
    %v546 = vmul.f32 %v544, %v491
    %548 = vrot.lane.b32.xlu0 %v545, 32
    %v549 = vpop.permute.xlu0 %548
    %v551 = vmul.f32 %v544, %v549
    %553 = vrot.lane.b32.xlu0 %v551, 32
    %v554 = vpop.permute.xlu0 %553
    %v556 = vadd.f32 %v546, %v554
    %v557 = vtanh.pop %v556
    %559 = vrot.lane.b32.xlu0 %v557, 32
    %v560 = vpop.permute.xlu0 %559
    %v562 = vmul.f32 %v544, %v560
    %s563 = scalar_lea.vmem [#allocation2], 56
    %v564 = vld [vmem:[%s563] sm:$0xff]
    %566 = vrot.lane.b32.xlu0 %v562, 64
    %v567 = vpop.permute.xlu0 %566
    %v568 = vsel %vm111, %v567, 0
    %570 = vmatpush.msra.mxu0 0.0
    %571 = vmatpush.msra.mxu0 0.0
    %572 = vmatpush.msra.mxu0 0.0
    %573 = vmatpush.msra.mxu0 0.0
    %574 = vmatpush.msra.mxu0 0.0
    %575 = vmatpush.msra.mxu0 0.0
    %576 = vmatpush.msra.mxu0 0.0
    %577 = vmatpush.msra.mxu0 0.0
    %578 = vmatpush.msra.mxu0 0.0
    %579 = vmatpush.msra.mxu0 0.0
    %580 = vmatpush.msra.mxu0 0.0
    %581 = vmatpush.msra.mxu0 0.0
    %582 = vmatpush.msra.mxu0 %v110
    %583 = vmatpush.msra.mxu0 %v109
    %584 = vmatpush.msra.mxu0 %v108
    %585 = vmatpush.msra.mxu0 %v107
    %586 = vmatmul.f32.gmra.mxu0 %v568
    %v587 = vpop.f32.mrf.mxu0
    %v588 = vadd.f32 0.0, %v587
    %589 = vdwg.mxu0
    %v590 = vadd.f32 %v564, %v588
    %v591 = vxor.u32 %v590, 2147483648
    %v592 = vmul.f32 %v591, 1.442695
    %v593 = vpow.pop %v592
    %v594 = vadd.f32 %v593, 1.0
    %v595 = vrcp.pop %v594
    %v596 = vmul.f32 %v594, %v595
    %v597 = vsub.f32 1.0, %v596
    %v598 = vmul.f32 %v595, %v597
    %v599 = vadd.f32 %v595, %v598
    %vm600 = vweird.f32 %v594
    %vm601 = vweird.f32 %v595
    %vm602 = vmor %vm600, %vm601
    %v603 = vsel %vm602, %v595, %v599
    %v604 = vand.u32 2147483647, %v594
    %vm605 = vcmp.eq.f32.partialorder %v604, 8.507059e+37
    %v606 = vand.u32 %v594, 2147483648
    %v607 = vor.u32 1.1754944e-38, %v606
    %v608 = vsel %vm605, %v607, %v603
    %v609 = vmul.f32 1.0, %v608
    %v610 = vtanh.pop %v590
    %v611 = vmul.f32 %v609, %v556
    %613 = vrot.lane.b32.xlu0 %v610, 32
    %v614 = vpop.permute.xlu0 %613
    %v616 = vmul.f32 %v609, %v614
    %618 = vrot.lane.b32.xlu0 %v616, 32
    %v619 = vpop.permute.xlu0 %618
    %v621 = vadd.f32 %v611, %v619
    %v622 = vtanh.pop %v621
    %624 = vrot.lane.b32.xlu0 %v622, 32
    %v625 = vpop.permute.xlu0 %624
    %v627 = vmul.f32 %v609, %v625
    %629 = vrot.lane.b32.xlu0 %v627, 64
    %v630 = vpop.permute.xlu0 %629
    %632 = vst.msk [vmem:[#allocation3] sm:$0xff] %vm111, %v630
    // Predicated region
    $region18: #{tpu_custom_call.1} parent=1 // pred_check
      _
    $region19: #{tpu_custom_call.1} parent=1 // pred_check_branch
      %634 = sbr.rel (0) target = $region21
    $region20: #{tpu_custom_call.1} parent=1 // pred_region
      %636 = vsyncadd [#allocation4], 0
      %s638 = sshll.u32 [#allocation3], 4
      %s639 = int_to_ptr.vmem [resolvable:$true] %s638
      %s640 = sshll.u32 %s4, 4
      %s641 = int_to_ptr.hbm [resolvable:$true] %s640
      %643 = dma.vmem_to_hbm [thread:$0]  %s639, 128, %s641, [#allocation4]
    $region21: #{tpu_custom_call.1} parent=1 // pred_fallthru
      _
    // Predicated region
    $region22: #{tpu_custom_call.1} parent=1 // pred_check
      _
    $region23: #{tpu_custom_call.1} parent=1 // pred_check_branch
      %645 = sbr.rel (0) target = $region25
    $region24: #{tpu_custom_call.1} parent=1 // pred_region
      %647 = dma.done [#allocation4], 128
    $region25: #{tpu_custom_call.1} parent=1 // pred_fallthru
      _
    %648 = vsyncpa [#allocation4], 1

</llo_original>
